<compile_context>
chip_gen: v7x
topology: tpu7x:2x2x1
jax: 0.10.0
libtpu: 0.0.40
codegen_flags: <defaults>
</compile_context>

<pallas_src>
import functools

import jax
import jax.numpy as jnp
from jax import lax
from jax.experimental import pallas as pl
from jax.experimental.pallas import tpu as pltpu

EPS = 1e-12      # F.normalize default eps
SCALER = 10.0
_LANE = 128


def _cosine_kernel(x_ref, w_ref, o_ref):
    # x_ref: (1, C, ts)      tile of x in native (N, C, H*W) layout
    # w_ref: (t_blk, C)      pre-normalized, pre-scaled class weights
    # o_ref: (1, t_blk, ts)  lane-dense output tile
    x = x_ref[0].astype(jnp.float32)                       # (C, ts)

    # 1 / max(||x_pixel||, eps) == rsqrt(max(sum(x^2), eps^2)); one value per
    # pixel (column), applied AFTER the matmul (linear, so exact).
    sq = jnp.sum(x * x, axis=0, keepdims=True)             # (1, ts)
    inv = lax.rsqrt(jnp.maximum(sq, EPS * EPS))            # (1, ts), EUP slot

    # MXU-native orientation: (t_blk, C) @ (C, ts) -> (t_blk, ts).
    out = jnp.dot(w_ref[...], x, preferred_element_type=jnp.float32)
    o_ref[0] = (out * inv).astype(o_ref.dtype)


def _vmem_budget_bytes():
    """Generation-aware VMEM budget (also used as vmem_limit_bytes)."""
    try:
        cap = pltpu.get_tpu_info().vmem_capacity_bytes
    except Exception:
        cap = 64 * 1024 * 1024  # conservative (v7x-sized) fallback
    # 5/8 of physical: ~40 MiB on v7x (64 MiB), ~80 MiB on v5e/v6e (128 MiB).
    return int(cap) * 5 // 8


def _pick_spatial_tile(hw128, n_batch, c, t_blk, budget, max_ts):
    """Largest 128-multiple divisor of hw128 fitting the VMEM budget."""
    k = hw128 // _LANE
    # Double-buffered f32 x-tile column + output-tile column per 128 lanes.
    bytes_per_128 = 2 * 4 * (c + t_blk) * _LANE
    d_cap = max(1, (budget * 4 // 5) // bytes_per_128)   # ~20% headroom
    d_cap = min(d_cap, k, max(1, max_ts // _LANE))
    for d in range(d_cap, 0, -1):
        if k % d != 0:
            continue
        # Keep >=2 independent grid points so both v7x TCs get work.
        if n_batch == 1 and k >= 2 and d == k:
            continue
        return d * _LANE
    return _LANE


@functools.partial(jax.jit,
                   static_argnames=("max_ts", "tot_block", "stream_dtype"))
def cosine_classifier_forward(x_nchw, w_cat, *, max_ts=8192, tot_block=256,
                              stream_dtype=jnp.float32):
    """x_nchw: (N, C, H, W). w_cat: (tot_classes, C). Returns (N, tot, H, W)."""
    N, C, H, W = x_nchw.shape
    tot = w_cat.shape[0]
    HW = H * W
    hw128 = ((HW + _LANE - 1) // _LANE) * _LANE           # minimal lane pad

    # Class-axis tiling: fully resident when small, blocked when large.
    if tot <= tot_block:
        t_blk, tot_pad = tot, tot
    else:
        t_blk = tot_block
        tot_pad = ((tot + t_blk - 1) // t_blk) * t_blk

    budget = _vmem_budget_bytes()
    ts = _pick_spatial_tile(hw128, N, C, t_blk, budget, max_ts)

    # Hoisted weight normalization + scaler: tiny (tot, C) op, done once.
    w = w_cat.astype(jnp.float32)
    w_n = (SCALER * w) / jnp.maximum(
        jnp.sqrt(jnp.sum(w * w, axis=1, keepdims=True)), EPS)
    if tot_pad != tot:
        w_n = jnp.pad(w_n, ((0, tot_pad - tot), (0, 0)))

    # Native NCHW: flatten spatial only (contiguous reshape, no transpose).
    # Pad at most to hw128 (ts divides hw128 by construction), so the big
    # wrapper-side pad/slice round-trips of the previous version are gone.
    x_r = x_nchw.reshape(N, C, HW).astype(stream_dtype)
    if hw128 != HW:
        x_r = jnp.pad(x_r, ((0, 0), (0, 0), (0, hw128 - HW)))

    grid = (N, hw128 // ts, tot_pad // t_blk)

    out = pl.pallas_call(
        _cosine_kernel,
        out_shape=jax.ShapeDtypeStruct((N, tot_pad, hw128), jnp.float32),
        grid_spec=pltpu.PrefetchScalarGridSpec(
            num_scalar_prefetch=0,
            grid=grid,
            in_specs=[
                # x tile index is constant across the innermost (class) axis,
                # so it is not re-fetched per class block.
                pl.BlockSpec((1, C, ts), lambda n, j, t: (n, 0, j)),
                pl.BlockSpec((t_blk, C), lambda n, j, t: (t, 0)),
            ],
            out_specs=pl.BlockSpec((1, t_blk, ts), lambda n, j, t: (n, t, j)),
        ),
        compiler_params=pltpu.CompilerParams(
            dimension_semantics=("parallel", "parallel", "arbitrary"),
            vmem_limit_bytes=budget,
        ),
    )(x_r, w_n)

    if tot_pad != tot:
        out = out[:, :tot, :]
    if hw128 != HW:
        out = out[:, :, :HW]
    # (N, tot, HW) -> (N, tot, H, W): matches torch.cat(out, dim=1) in NCHW.
    return out.reshape(N, tot, H, W)


def make_weights(key, classes, channels):
    """Deterministic per-step 1x1-conv weights, shapes (c_i, channels, 1, 1)."""
    ws = []
    bound = 1.0 / (channels ** 0.5)
    for i, c in enumerate(classes):
        k = jax.random.fold_in(key, i)
        ws.append(jax.random.uniform(k, (c, channels, 1, 1),
                                     minval=-bound, maxval=bound,
                                     dtype=jnp.float32))
    return ws


def reference_forward(x_nchw, weight_list):
    """Pure-JAX reference replicating the PyTorch forward exactly."""
    x = jnp.asarray(x_nchw, jnp.float32)
    xn = x / jnp.maximum(
        jnp.sqrt(jnp.sum(x * x, axis=1, keepdims=True)), EPS)
    outs = []
    for w in weight_list:
        wn = w / jnp.maximum(
            jnp.sqrt(jnp.sum(w * w, axis=1, keepdims=True)), EPS)
        o = jnp.einsum("nchw,ocij->nohw", xn, wn)   # 1x1 conv over channels
        outs.append(SCALER * o)
    return jnp.concatenate(outs, axis=1)


# TODO(synk): get_centers / imprint_weights_* are host-side parameter
# bookkeeping (not part of the forward pass) and are intentionally not ported.

if __name__ == "__main__":
    key = jax.random.PRNGKey(0)
    k_x, k_w = jax.random.split(key)

    # Small shapes: batch=2, channels=32, spatial=16x16, classes per step = [3, 5]
    N, C, H, W = 2, 32, 16, 16
    classes = [3, 5]

    x = jax.random.normal(k_x, (N, C, H, W), dtype=jnp.float32)
    weight_list = make_weights(k_w, classes, C)
    # Concatenate + squeeze the 1x1 spatial dims -> (tot_classes, channels)
    w_cat = jnp.concatenate([w.reshape(w.shape[0], C) for w in weight_list],
                            axis=0)

    out = cosine_classifier_forward(x, w_cat)
    out = jax.block_until_ready(out)

    ref = reference_forward(x, weight_list)
    assert out.shape == (N, sum(classes), H, W), out.shape
    assert jnp.allclose(out, ref, atol=1e-4, rtol=1e-4), float(
        jnp.max(jnp.abs(out - ref)))

    print("KERNEL_OK")
</pallas_src>

<mosaic_0001>
module attributes {stable_mosaic.version = 11 : i64} {
  func.func @_cosine_kernel(%arg0: i32, %arg1: i32, %arg2: i32, %arg3: memref<1x32x256xf32, #tpu.memory_space<vmem>>, %arg4: memref<8x32xf32, #tpu.memory_space<vmem>>, %arg5: memref<1x8x256xf32, #tpu.memory_space<vmem>>) attributes {dimension_semantics = [#tpu.dimension_semantics<parallel>, #tpu.dimension_semantics<parallel>, #tpu.dimension_semantics<arbitrary>], iteration_bounds = array<i64: 2, 1, 1>, scalar_prefetch = 0 : i64, scratch_operands = 0 : i64, tpu.core_type = #tpu.core_type<tc>, window_params = [{transform_indices = @transform_0, window_bounds = array<i64: 1, 32, 256>}, {transform_indices = @transform_1, window_bounds = array<i64: 8, 32>}, {transform_indices = @transform_2, window_bounds = array<i64: 1, 8, 256>}]} {
    %c0 = arith.constant 0 : index
    %c0_0 = arith.constant 0 : index
    %c0_1 = arith.constant 0 : index
    %0 = vector.load %arg3[%c0, %c0_0, %c0_1] : memref<1x32x256xf32, #tpu.memory_space<vmem>>, vector<1x32x256xf32>
    %1 = vector.shape_cast %0 : vector<1x32x256xf32> to vector<32x256xf32>
    %2 = arith.mulf %1, %1 : vector<32x256xf32>
    %cst = arith.constant dense<0.000000e+00> : vector<256xf32>
    %3 = vector.multi_reduction <add>, %2, %cst [0] : vector<32x256xf32> to vector<256xf32>
    %4 = vector.shape_cast %3 : vector<256xf32> to vector<1x256xf32>
    %cst_2 = arith.constant 1.000000e-24 : f32
    %5 = vector.broadcast %cst_2 : f32 to vector<1x256xf32>
    %6 = arith.maximumf %4, %5 : vector<1x256xf32>
    %7 = math.rsqrt %6 : vector<1x256xf32>
    %c0_3 = arith.constant 0 : index
    %c0_4 = arith.constant 0 : index
    %8 = vector.load %arg4[%c0_3, %c0_4] : memref<8x32xf32, #tpu.memory_space<vmem>>, vector<8x32xf32>
    %cst_5 = arith.constant dense<0.000000e+00> : vector<8x256xf32>
    %9 = tpu.matmul %8, %1, %cst_5 {dimension_numbers = #tpu.dot_dimension_numbers<[1], [0], [0], [1], [0, 0, 1, 1], [], []>} : vector<8x32xf32>, vector<32x256xf32>, vector<8x256xf32> -> vector<8x256xf32>
    %10 = vector.broadcast %7 : vector<1x256xf32> to vector<8x256xf32>
    %11 = arith.mulf %9, %10 : vector<8x256xf32>
    %c0_6 = arith.constant 0 : index
    %c0_7 = arith.constant 0 : index
    %c0_8 = arith.constant 0 : index
    %12 = vector.load %arg5[%c0_6, %c0_7, %c0_8] : memref<1x8x256xf32, #tpu.memory_space<vmem>>, vector<1x8x256xf32>
    %13 = vector.shape_cast %12 : vector<1x8x256xf32> to vector<8x256xf32>
    %14 = vector.shape_cast %11 : vector<8x256xf32> to vector<1x8x256xf32>
    tpu.vector_store %arg5[%c0_6, %c0_7, %c0_8], %14 {strides = array<i32>} : memref<1x8x256xf32, #tpu.memory_space<vmem>>, vector<1x8x256xf32>,
    return
  }
  func.func @transform_0(%arg0: i32, %arg1: i32, %arg2: i32) -> (i32, i32, i32) {
    %c0_i32 = arith.constant 0 : i32
    %c0_i32_0 = arith.constant 0 : i32
    return %arg0, %c0_i32, %arg1 : i32, i32, i32
  }
  func.func @transform_1(%arg0: i32, %arg1: i32, %arg2: i32) -> (i32, i32) {
    %c0_i32 = arith.constant 0 : i32
    %c0_i32_0 = arith.constant 0 : i32
    return %arg2, %c0_i32 : i32, i32
  }
  func.func @transform_2(%arg0: i32, %arg1: i32, %arg2: i32) -> (i32, i32, i32) {
    %c0_i32 = arith.constant 0 : i32
    return %arg0, %arg2, %arg1 : i32, i32, i32
  }
}

</mosaic_0001>

<llo_original>
// kernel: cosine_classifier_forward.1
$region0: #{cosine_classifier_forward.1}
  #allocation0 [shape = 'u32[]', space=smem, size = 0x4, offset = 0x4, fixed_abs, tag = 'smem constant byte address 0x4 - core index']
  #allocation1 [shape = 'u32[144,128]{1,0:T(1,128)}', space=vmem, size = 0x12000, scoped, tag = 'internal scratch']
  %s0 = inlined_call_operand.vmem [shape: f32[2,32,256], index: 0, kind: input, shape index: {}]
  %s1 = inlined_call_operand.vmem [shape: f32[8,32], index: 1, kind: input, shape index: {}]
  %s2 = inlined_call_operand.vmem [shape: f32[2,8,256], index: 2, kind: output, shape index: {}]
  %s3 = sld [smem:[#allocation0]]
  $region41: #{cosine_classifier_forward.1} parent=0
    _
  %s5 = ssub.s32 1, %s3
  %s6 = scalar_select 0, %s5, %s3
  loop: start=0, step=1, limit=4
  $region2: #{cosine_classifier_forward.1} parent=0 // loop_pre_header
    _
  $region3: #{cosine_classifier_forward.1} parent=0 // loop_header
    %s8 = sphi 0, %s12
    %p9 = scmp.ge.s32.totalorder %s8, 4
    %s15 = sphi 0, %s34
    %s16 = sphi 0, %s30
    %s17 = sphi 0, %s26
    %s18 = sphi 0, %s15
    %s19 = sphi 0, %s16
    %s20 = sphi 0, %s17
    %s21 = sphi 0, %s18
    %s22 = sphi 0, %s19
    %s23 = sphi 0, %s20
    %s39 = sphi 0, %s41
    %s42 = sphi 0, %s39
    %s43 = sphi 0, %s42
    %s59 = sphi 0, %s43
    %s65 = sphi 0, %s67
    %s68 = sphi 0, %s65
    %s69 = sphi 0, %s68
    %s85 = sphi 0, %s69
    %s95 = sphi 0, %s97
    %s98 = sphi 0, %s95
    %s99 = sphi 0, %s98
    %s115 = sphi 0, %s99
  $region4: #{cosine_classifier_forward.1} parent=0 // loop_header_branch
    %11 = sbr.rel (%p9) target = $region8
  $region5: #{cosine_classifier_forward.1} parent=0 // loop_body
    %s13 = ssub.s32 %s8, 1
    %s14 = ssub.s32 %s8, 2
    %s24 = sadd.s32 1, %s17
    %p25 = scmp.ge.s32.totalorder %s24, 1
    %s26 = scalar_select %p25, 0, %s24
    %s27 = sadd.s32 1, %s16
    %s28 = scalar_select %p25, %s27, %s16
    %p29 = scmp.ge.s32.totalorder %s28, 1
    %s30 = scalar_select %p29, 0, %s28
    %s31 = sadd.s32 1, %s15
    %s32 = scalar_select %p29, %s31, %s15
    %p33 = scmp.ge.s32.totalorder %s32, 2
    %s34 = scalar_select %p33, 0, %s32
    %s35 = ssub.s32 %s15, %s34
    %s36 = ssub.s32 %s16, %s30
    %s37 = sor.u32 %s35, %s36
    %p38 = scmp.eq.s32.totalorder %s37, 0
    %s40 = sadd.s32 %s39, 1
    %s41 = scalar_select %p38, %s39, %s40
    %p44 = pneg %p38
    %p45 = scmp.eq.s32.totalorder %s8, 1
    %p46 = por %p44, %p45
    %p47 = scmp.ne.s32.totalorder %s39, %s42
    %p48 = scmp.eq.s32.totalorder %s8, 0
    %p49 = por %p47, %p48
    %p50 = scmp.ne.s32.totalorder %s39, %s42
    %p51 = scmp.eq.s32.totalorder %s13, 1
    %p52 = por %p50, %p51
    %p53 = scmp.ne.s32.totalorder %s42, %s43
    %p54 = scmp.eq.s32.totalorder %s13, 0
    %p55 = por %p53, %p54
    %p56 = scmp.ne.s32.totalorder %s42, %s43
    %p57 = scmp.eq.s32.totalorder %s14, 1
    %p58 = por %p56, %p57
    %p60 = scmp.ne.s32.totalorder %s43, %s59
    %p61 = scmp.eq.s32.totalorder %s14, 0
    %p62 = por %p60, %p61
    %s63 = ssub.s32 %s17, %s26
    %p64 = scmp.eq.s32.totalorder %s63, 0
    %s66 = sadd.s32 %s65, 1
    %s67 = scalar_select %p64, %s65, %s66
    %p70 = pneg %p64
    %p71 = scmp.eq.s32.totalorder %s8, 1
    %p72 = por %p70, %p71
    %p73 = scmp.ne.s32.totalorder %s65, %s68
    %p74 = scmp.eq.s32.totalorder %s8, 0
    %p75 = por %p73, %p74
    %p76 = scmp.ne.s32.totalorder %s65, %s68
    %p77 = scmp.eq.s32.totalorder %s13, 1
    %p78 = por %p76, %p77
    %p79 = scmp.ne.s32.totalorder %s68, %s69
    %p80 = scmp.eq.s32.totalorder %s13, 0
    %p81 = por %p79, %p80
    %p82 = scmp.ne.s32.totalorder %s68, %s69
    %p83 = scmp.eq.s32.totalorder %s14, 1
    %p84 = por %p82, %p83
    %p86 = scmp.ne.s32.totalorder %s69, %s85
    %p87 = scmp.eq.s32.totalorder %s14, 0
    %p88 = por %p86, %p87
    %s89 = ssub.s32 %s15, %s34
    %s90 = ssub.s32 %s17, %s26
    %s91 = sor.u32 %s89, %s90
    %s92 = ssub.s32 %s16, %s30
    %s93 = sor.u32 %s91, %s92
    %p94 = scmp.eq.s32.totalorder %s93, 0
    %s96 = sadd.s32 %s95, 1
    %s97 = scalar_select %p94, %s95, %s96
    %p100 = pneg %p94
    %p101 = scmp.eq.s32.totalorder %s8, 1
    %p102 = por %p100, %p101
    %p103 = scmp.ne.s32.totalorder %s95, %s98
    %p104 = scmp.eq.s32.totalorder %s8, 0
    %p105 = por %p103, %p104
    %p106 = scmp.ne.s32.totalorder %s95, %s98
    %p107 = scmp.eq.s32.totalorder %s13, 1
    %p108 = por %p106, %p107
    %p109 = scmp.ne.s32.totalorder %s98, %s99
    %p110 = scmp.eq.s32.totalorder %s13, 0
    %p111 = por %p109, %p110
    %p112 = scmp.ne.s32.totalorder %s98, %s99
    %p113 = scmp.eq.s32.totalorder %s14, 1
    %p114 = por %p112, %p113
    %p116 = scmp.ne.s32.totalorder %s99, %s115
    %p117 = scmp.eq.s32.totalorder %s14, 0
    %p118 = por %p116, %p117
    %p119 = scmp.le.s32.totalorder 1, %s8
    %p120 = scmp.lt.s32.totalorder %s8, 3
    %p121 = pnand %p119, %p120
    %p122 = pneg %p121
    // Predicated region
    $region9: #{cosine_classifier_forward.1} parent=5 // pred_check
      _
    $region10: #{cosine_classifier_forward.1} parent=5 // pred_check_branch
      %124 = sbr.rel (%p121) target = $region12
    $region11: #{cosine_classifier_forward.1} parent=5 // pred_region
      %s125 = ssub.s32 %s8, 1
      // Predicated region
      $region13: #{cosine_classifier_forward.1} parent=11 // pred_check
        %p126 = pneg %p81
      $region14: #{cosine_classifier_forward.1} parent=11 // pred_check_branch
        %128 = sbr.rel (%p126) target = $region16
      $region15: #{cosine_classifier_forward.1} parent=11 // pred_region
        %p129 = scmp.lt.s32.totalorder %s20, 0
        %s130 = scalar_select %p129, %s20, 0
        %s131 = smul.addr %s130, 8
        %s132 = scalar_lea.vmem %s1, %s131
      $region16: #{cosine_classifier_forward.1} parent=11 // pred_fallthru
        _
    $region12: #{cosine_classifier_forward.1} parent=5 // pred_fallthru
      _
    %p133 = scmp.lt.s32.totalorder %s8, 2
    // Predicated region
    $region17: #{cosine_classifier_forward.1} parent=5 // pred_check
      %p134 = pneg %p133
    $region18: #{cosine_classifier_forward.1} parent=5 // pred_check_branch
      %136 = sbr.rel (%p134) target = $region20
    $region19: #{cosine_classifier_forward.1} parent=5 // pred_region
      // Predicated region
      $region21: #{cosine_classifier_forward.1} parent=19 // pred_check
        %p137 = pneg %p49
      $region22: #{cosine_classifier_forward.1} parent=19 // pred_check_branch
        %139 = sbr.rel (%p137) target = $region24
      $region23: #{cosine_classifier_forward.1} parent=19 // pred_region
        %s140 = smul.u32 2, %s16
        %p141 = scmp.lt.s32.totalorder %s15, 1
        %s142 = scalar_select %p141, %s15, 1
        %p143 = scmp.lt.s32.totalorder %s140, 1
        %s144 = scalar_select %p143, %s140, 1
        %s145 = smul.addr %s142, 8
        %s146 = sadd.s32 %s144, %s145
        %s147 = smul.addr %s146, 8
        %s148 = scalar_lea.vmem %s0, %s147
        %s149 = smul.u32 2, %s16
      $region24: #{cosine_classifier_forward.1} parent=19 // pred_fallthru
        _
    $region20: #{cosine_classifier_forward.1} parent=5 // pred_fallthru
      _
    %p150 = scmp.le.s32.totalorder 1, %s8
    %p151 = scmp.lt.s32.totalorder %s8, 3
    %p152 = pnand %p150, %p151
    %p153 = pneg %p152
    // Predicated region
    $region25: #{cosine_classifier_forward.1} parent=5 // pred_check
      _
    $region26: #{cosine_classifier_forward.1} parent=5 // pred_check_branch
      %155 = sbr.rel (%p152) target = $region28
    $region27: #{cosine_classifier_forward.1} parent=5 // pred_region
      %s156 = ssub.s32 %s8, 1
      %s157 = smul.u32 2, %s19
      %p158 = scmp.lt.s32.totalorder %s18, 1
      %s159 = scalar_select %p158, %s18, 1
      %p160 = scmp.lt.s32.totalorder %s157, 1
      %s161 = scalar_select %p160, %s157, 1
      %s162 = smul.addr %s159, 8
      %s163 = sadd.s32 %s161, %s162
      %s164 = smul.addr %s163, 8
      %s165 = scalar_lea.vmem %s0, %s164
      %p166 = pneg %p55
      %p167 = pneg %p52
      %p168 = scmp.lt.s32.totalorder %s20, 0
      %s169 = scalar_select %p168, %s20, 0
      %s170 = smul.addr %s169, 8
      %s171 = scalar_lea.vmem %s1, %s170
      %p172 = pneg %p81
      %p173 = pneg %p78
      %p174 = pneg %p111
      %p175 = pneg %p108
      %s176 = smul.u32 2, %s19
      %p177 = scmp.lt.s32.totalorder %s18, 1
      %s178 = scalar_select %p177, %s18, 1
      %p179 = scmp.lt.s32.totalorder %s20, 0
      %s180 = scalar_select %p179, %s20, 0
      %p181 = scmp.lt.s32.totalorder %s176, 1
      %s182 = scalar_select %p181, %s176, 1
      %s183 = smul.addr %s180, 2
      %s184 = sadd.s32 %s182, %s183
      %s185 = smul.addr %s178, 2
      %s186 = sadd.s32 %s184, %s185
      %s187 = smul.addr %s186, 8
      %s188 = scalar_lea.vmem %s2, %s187
      %s189 = smul.u32 2, %s19
      %p190 = scmp.lt.s32.totalorder %s18, 1
      %s191 = scalar_select %p190, %s18, 1
      %p192 = scmp.lt.s32.totalorder %s189, 1
      %s193 = scalar_select %p192, %s189, 1
      %s194 = smul.addr %s191, 8
      %s195 = sadd.s32 %s193, %s194
      %s196 = smul.addr %s195, 8
      %s197 = scalar_lea.vmem %s0, %s196
      %s198 = smul.u32 2, %s19
      %p199 = scmp.lt.s32.totalorder %s20, 0
      %s200 = scalar_select %p199, %s20, 0
      %s201 = smul.addr %s200, 8
      %s202 = scalar_lea.vmem %s1, %s201
      %s203 = smul.u32 2, %s19
      %p204 = scmp.lt.s32.totalorder %s18, 1
      %s205 = scalar_select %p204, %s18, 1
      %p206 = scmp.lt.s32.totalorder %s20, 0
      %s207 = scalar_select %p206, %s20, 0
      %p208 = scmp.lt.s32.totalorder %s203, 1
      %s209 = scalar_select %p208, %s203, 1
      %s210 = smul.addr %s207, 2
      %s211 = sadd.s32 %s209, %s210
      %s212 = smul.addr %s205, 2
      %s213 = sadd.s32 %s211, %s212
      %s214 = smul.addr %s213, 8
      %s215 = scalar_lea.vmem %s2, %s214
      %s216 = smul.u32 2, %s19
      %v217 = vld [vmem:[%s197] sm:$0xff]
      %v218 = vld [vmem:[%s197 + $0x8] sm:$0xff]
      %v219 = vld [vmem:[%s197 + $0x10] sm:$0xff]
      %v220 = vld [vmem:[%s197 + $0x18] sm:$0xff]
      %v221 = vld [vmem:[%s197 + $0x20] sm:$0xff]
      %v222 = vld [vmem:[%s197 + $0x28] sm:$0xff]
      %v223 = vld [vmem:[%s197 + $0x30] sm:$0xff]
      %v224 = vld [vmem:[%s197 + $0x38] sm:$0xff]
      %v225 = vmul.f32 %v217, %v217
      %v226 = vmul.f32 %v218, %v218
      %v227 = vmul.f32 %v219, %v219
      %v228 = vmul.f32 %v220, %v220
      %v229 = vmul.f32 %v221, %v221
      %v230 = vmul.f32 %v222, %v222
      %v231 = vmul.f32 %v223, %v223
      %v232 = vmul.f32 %v224, %v224
      %v233 = vadd.f32 %v225, %v227
      %v234 = vadd.f32 %v233, %v229
      %v235 = vadd.f32 %v234, %v231
      %v236 = vrot.slane %v235, 4
      %v237 = vadd.f32 %v235, %v236
      %v238 = vrot.slane %v237, 2
      %v239 = vadd.f32 %v237, %v238
      %v240 = vrot.slane %v239, 1
      %v241 = vadd.f32 %v239, %v240
      %v242 = vadd.f32 %v226, %v228
      %v243 = vadd.f32 %v242, %v230
      %v244 = vadd.f32 %v243, %v232
      %v245 = vrot.slane %v244, 4
      %v246 = vadd.f32 %v244, %v245
      %v247 = vrot.slane %v246, 2
      %v248 = vadd.f32 %v246, %v247
      %v249 = vrot.slane %v248, 1
      %v250 = vadd.f32 %v248, %v249
      %v251 = vmax.f32 %v241, 1e-24
      %v252 = vmax.f32 %v250, 1e-24
      %v253 = vrsqrt.pop %v251
      %v254 = vrsqrt.pop %v252
      %v255 = vld [vmem:[%s202] sm:$0xff]
      %vm256 = vcmask 261120
      %v258 = vsel %vm256, %v255, 0
      %260 = vmatprep.subr.mxu0 %v218
      %261 = vmatpush1.msra.mxu0 %v217
      %262 = vmatprep.subr.mxu0 %v220
      %263 = vmatpush1.msra.mxu0 %v219
      %264 = vmatprep.subr.mxu0 %v222
      %265 = vmatpush1.msra.mxu0 %v221
      %266 = vmatprep.subr.mxu0 %v224
      %267 = vmatpush1.msra.mxu0 %v223
      %268 = vmatprep.subr.mxu0 0.0
      %269 = vmatpush1.msra.mxu0 0.0
      %270 = vmatprep.subr.mxu0 0.0
      %271 = vmatpush1.msra.mxu0 0.0
      %272 = vmatprep.subr.mxu0 0.0
      %273 = vmatpush1.msra.mxu0 0.0
      %274 = vmatprep.subr.mxu0 0.0
      %275 = vmatpush1.msra.mxu0 0.0
      %276 = vmatprep.subr.mxu0 0.0
      %277 = vmatpush1.msra.mxu0 0.0
      %278 = vmatprep.subr.mxu0 0.0
      %279 = vmatpush1.msra.mxu0 0.0
      %280 = vmatprep.subr.mxu0 0.0
      %281 = vmatpush1.msra.mxu0 0.0
      %282 = vmatprep.subr.mxu0 0.0
      %283 = vmatpush1.msra.mxu0 0.0
      %284 = vmatprep.subr.mxu0 0.0
      %285 = vmatpush1.msra.mxu0 0.0
      %286 = vmatprep.subr.mxu0 0.0
      %287 = vmatpush1.msra.mxu0 0.0
      %288 = vmatprep.subr.mxu0 0.0
      %289 = vmatpush1.msra.mxu0 0.0
      %290 = vmatprep.subr.mxu0 0.0
      %291 = vmatpush1.msra.mxu0 0.0
      %292 = vmatprep.subr.mxu0 0.0
      %293 = vmatpush1.msra.mxu0 0.0
      %294 = vmatprep.subr.mxu0 0.0
      %295 = vmatpush1.msra.mxu0 0.0
      %296 = vmatprep.subr.mxu0 0.0
      %297 = vmatpush1.msra.mxu0 0.0
      %298 = vmatprep.subr.mxu0 0.0
      %299 = vmatpush1.msra.mxu0 0.0
      %300 = vmatprep.subr.mxu0 0.0
      %301 = vmatpush1.msra.mxu0 0.0
      %302 = vmatprep.subr.mxu0 0.0
      %303 = vmatpush1.msra.mxu0 0.0
      %304 = vmatprep.subr.mxu0 0.0
      %305 = vmatpush1.msra.mxu0 0.0
      %306 = vmatprep.subr.mxu0 0.0
      %307 = vmatpush1.msra.mxu0 0.0
      %308 = vmatprep.subr.mxu0 0.0
      %309 = vmatpush1.msra.mxu0 0.0
      %310 = vmatprep.subr.mxu0 0.0
      %311 = vmatpush1.msra.mxu0 0.0
      %312 = vmatprep.subr.mxu0 0.0
      %313 = vmatpush1.msra.mxu0 0.0
      %314 = vmatprep.subr.mxu0 0.0
      %315 = vmatpush1.msra.mxu0 0.0
      %316 = vmatprep.subr.mxu0 0.0
      %317 = vmatpush1.msra.mxu0 0.0
      %318 = vmatprep.subr.mxu0 0.0
      %319 = vmatpush1.msra.mxu0 0.0
      %320 = vmatprep.subr.mxu0 0.0
      %321 = vmatpush1.msra.mxu0 0.0
      %322 = vmatprep.subr.mxu0 0.0
      %323 = vmatpush1.msra.mxu0 0.0
      %324 = vmatprep.mubr.f32.mxu0 0.0
      %325 = vmatmul.mubr.f32.gmra.mrb[0].mxu0 %v258
      %v326 = vpop.f32.mrb[0].mxu0
      %v327 = vadd.f32 0.0, %v326
      %v328 = vpop.f32.mrb[0].mxu0
      %v329 = vadd.f32 0.0, %v328
      %330 = vdwg.mxu0
      %v331 = vmul.f32 %v327, %v253
      %v332 = vmul.f32 %v329, %v254
      %333 = vst [vmem:[%s215] sm:$0xff] %v331
      %334 = vst [vmem:[%s215 + $0x8] sm:$0xff] %v332
      %s335 = smul.u32 2, %s19
      %p336 = scmp.lt.s32.totalorder %s18, 1
      %s337 = scalar_select %p336, %s18, 1
      %p338 = scmp.lt.s32.totalorder %s20, 0
      %s339 = scalar_select %p338, %s20, 0
      %p340 = scmp.lt.s32.totalorder %s335, 1
      %s341 = scalar_select %p340, %s335, 1
      %s342 = smul.addr %s339, 2
      %s343 = sadd.s32 %s341, %s342
      %s344 = smul.addr %s337, 2
      %s345 = sadd.s32 %s343, %s344
      %s346 = smul.addr %s345, 8
      %s347 = scalar_lea.vmem %s2, %s346
      // Predicated region
      $region29: #{cosine_classifier_forward.1} parent=27 // pred_check
        %p348 = pneg %p108
      $region30: #{cosine_classifier_forward.1} parent=27 // pred_check_branch
        %350 = sbr.rel (%p348) target = $region32
      $region31: #{cosine_classifier_forward.1} parent=27 // pred_region
        %s351 = smul.u32 2, %s19
      $region32: #{cosine_classifier_forward.1} parent=27 // pred_fallthru
        _
    $region28: #{cosine_classifier_forward.1} parent=5 // pred_fallthru
      _
    %p352 = scmp.le.s32.totalorder 2, %s8
    // Predicated region
    $region33: #{cosine_classifier_forward.1} parent=5 // pred_check
      %p353 = pneg %p352
    $region34: #{cosine_classifier_forward.1} parent=5 // pred_check_branch
      %355 = sbr.rel (%p353) target = $region36
    $region35: #{cosine_classifier_forward.1} parent=5 // pred_region
      %s356 = ssub.s32 %s8, 2
      // Predicated region
      $region37: #{cosine_classifier_forward.1} parent=35 // pred_check
        %p357 = pneg %p114
      $region38: #{cosine_classifier_forward.1} parent=35 // pred_check_branch
        %359 = sbr.rel (%p357) target = $region40
      $region39: #{cosine_classifier_forward.1} parent=35 // pred_region
        %s360 = smul.u32 2, %s22
        %p361 = scmp.lt.s32.totalorder %s21, 1
        %s362 = scalar_select %p361, %s21, 1
        %p363 = scmp.lt.s32.totalorder %s23, 0
        %s364 = scalar_select %p363, %s23, 0
        %p365 = scmp.lt.s32.totalorder %s360, 1
        %s366 = scalar_select %p365, %s360, 1
        %s367 = smul.addr %s364, 2
        %s368 = sadd.s32 %s366, %s367
        %s369 = smul.addr %s362, 2
        %s370 = sadd.s32 %s368, %s369
        %s371 = smul.addr %s370, 8
        %s372 = scalar_lea.vmem %s2, %s371
      $region40: #{cosine_classifier_forward.1} parent=35 // pred_fallthru
        _
    $region36: #{cosine_classifier_forward.1} parent=5 // pred_fallthru
      _
  $region6: #{cosine_classifier_forward.1} parent=0 // loop_footer
    %s12 = sadd.s32 1, %s8
  $region7: #{cosine_classifier_forward.1} parent=0 // loop_footer_branch
    %7 = sbr.rel target = $region3
  $region8: #{cosine_classifier_forward.1} parent=0 // loop_exit
    _

</llo_original>
